<compile_context>
chip_gen: v5e
topology: v5e:2x2
jax: 0.10.0
libtpu: 0.0.40
codegen_flags: <defaults>
</compile_context>

<pallas_src>
import functools

import jax
import jax.numpy as jnp
from jax.experimental import pallas as pl
from jax.experimental.pallas import tpu as pltpu


def _warp_kernel(labels_ref, x_ref, rand_ref, out_ref, *, y, col_bits, max_trials):
    bb = x_ref.shape[0]
    x = x_ref[...].astype(jnp.float32)        # scores tile (bb, Y)
    rand = rand_ref[...]                      # (bb, Y) int32 draws, < 2^(30-col_bits)
    labels = labels_ref[...]                  # (bb, 1) int32 positive label; -1 => dead row

    col = jax.lax.broadcasted_iota(jnp.int32, (bb, y), 1)

    # score of the positive label (reduction 1)
    pos_mask = col == labels
    s_pos = jnp.sum(jnp.where(pos_mask, x, 0.0), axis=1, keepdims=True)

    # Packed sortable key: high bits = random draw, low bits = column index.
    # Unique per row, so one min gives both the permutation winner and its
    # column, and the rank count has no float-tie ambiguity.
    key = (rand << col_bits) | col            # int32 in [0, 2^30)
    sentinel = jnp.int32(1 << 30)

    neg_mask = jnp.logical_not(pos_mask)
    violating = (1.0 + x - s_pos) >= 0.0
    valid = jnp.logical_and(neg_mask, violating)

    min_key = jnp.min(jnp.where(valid, key, sentinel), axis=1, keepdims=True)  # reduction 2
    found = min_key < sentinel

    chosen_col = min_key & jnp.int32((1 << col_bits) - 1)
    s_neg = jnp.sum(jnp.where(col == chosen_col, x, 0.0), axis=1, keepdims=True)  # reduction 3

    # num_trials = rank of the chosen negative in the random permutation of negatives
    key_neg = jnp.where(neg_mask, key, sentinel)
    rank = 1.0 + jnp.sum((key_neg < min_key).astype(jnp.float32),
                         axis=1, keepdims=True)                                 # reduction 4

    success = jnp.logical_and(
        jnp.logical_and(found, rank <= float(max_trials)), labels >= 0)
    L = jnp.where(success,
                  jnp.log(jnp.maximum(jnp.floor((float(y) - 1.0) / rank), 1.0)),
                  0.0)
    loss = L * (1.0 - s_pos + s_neg)          # (bb, 1); L == 0 zeroes failed/dead rows

    # Lane-dense per-tile partial sum (avoids a masked (1,1) store).
    partial = jnp.sum(loss, axis=0, keepdims=True)                # (1, 1)
    out_ref[...] = jnp.broadcast_to(partial, out_ref.shape).astype(jnp.float32)


def warp_loss(scores, target, rng_key, max_num_trials=None, block_b=None):
    """Pallas WARPLoss.forward. Returns float32 of shape (1,).

    `rng_key` supplies the negative-sampling randomness; pass a fresh key each
    call (the PyTorch reference draws fresh randoms every forward).
    """
    B, Y = scores.shape
    assert target.shape == (B, Y)
    if max_num_trials is None:
        max_num_trials = Y - 1

    # One-hot target -> int32 positive label per row. Rows with no positive get
    # -1 and contribute zero loss (the reference would crash on such rows).
    has_pos = jnp.any(target != 0, axis=1)
    labels = jnp.where(has_pos, jnp.argmax(target, axis=1), -1).astype(jnp.int32)

    # Random draw per (row, label), kept in the integer domain.
    col_bits = max(1, int(Y - 1).bit_length())
    rand_bits = 30 - col_bits
    assert rand_bits >= 10, "Y too large for 32-bit packed sampling keys"
    rand = (jax.random.bits(rng_key, (B, Y), dtype=jnp.uint32)
            >> (32 - rand_bits)).astype(jnp.int32)

    # Batch tiling: multiples of 8 sublanes; marked "parallel" for megacore.
    if block_b is None:
        block_b = min(256, 8 * pl.cdiv(B, 8))
    block_b = max(8, (block_b // 8) * 8)
    num_tiles = pl.cdiv(B, block_b)
    b_pad = num_tiles * block_b
    if b_pad != B:
        scores = jnp.pad(scores, ((0, b_pad - B), (0, 0)))
        rand = jnp.pad(rand, ((0, b_pad - B), (0, 0)))
        labels = jnp.pad(labels, (0, b_pad - B), constant_values=-1)
    labels = labels.reshape(b_pad, 1)

    # TODO(synk): for very large label counts, also tile Y (multiples of 128
    # lanes), carrying running (min-key, rank-count, s_pos) state in VMEM
    # scratch and finalizing with pl.when on the last Y step.
    kernel = functools.partial(_warp_kernel, y=Y, col_bits=col_bits,
                               max_trials=max_num_trials)
    out = pl.pallas_call(
        kernel,
        out_shape=jax.ShapeDtypeStruct((num_tiles * 8, 128), jnp.float32),
        grid=(num_tiles,),
        in_specs=[
            pl.BlockSpec((block_b, 1), lambda i: (i, 0)),   # labels
            pl.BlockSpec((block_b, Y), lambda i: (i, 0)),   # scores
            pl.BlockSpec((block_b, Y), lambda i: (i, 0)),   # packed random draws
        ],
        out_specs=pl.BlockSpec((8, 128), lambda i: (i, 0)),
        compiler_params=pltpu.CompilerParams(
            dimension_semantics=("parallel",),
            vmem_limit_bytes=32 * 1024 * 1024,
        ),
    )(labels, scores, rand)

    # Each tile's (8,128) output block is filled with its partial sum.
    partials = out[::8, 0]
    return jnp.sum(partials).reshape(1)   # matches torch.sum(loss, dim=0, keepdim=True)


if __name__ == "__main__":
    key = jax.random.PRNGKey(0)
    B, Y = 8, 16                      # batch of 8 examples, 16 labels
    kx, kt, ks = jax.random.split(key, 3)

    scores = jax.random.normal(kx, (B, Y), dtype=jnp.float32)
    lbl = jax.random.randint(kt, (B,), 0, Y)
    target = jax.nn.one_hot(lbl, Y, dtype=jnp.float32)   # one positive per row

    out = warp_loss(scores, target, ks)    # max_num_trials=None -> Y-1
    jax.block_until_ready(out)
    assert out.shape == (1,) and out.dtype == jnp.float32
    assert bool(jnp.isfinite(out[0]))
    print("KERNEL_OK")
</pallas_src>

<mosaic_0001>
module attributes {stable_mosaic.version = 11 : i64} {
  func.func @_warp_kernel(%arg0: i32, %arg1: memref<8x1xi32, #tpu.memory_space<vmem>>, %arg2: memref<8x16xf32, #tpu.memory_space<vmem>>, %arg3: memref<8x16xi32, #tpu.memory_space<vmem>>, %arg4: memref<8x128xf32, #tpu.memory_space<vmem>>) attributes {dimension_semantics = [#tpu.dimension_semantics<parallel>], iteration_bounds = array<i64: 1>, scalar_prefetch = 0 : i64, scratch_operands = 0 : i64, tpu.core_type = #tpu.core_type<tc>, window_params = [{transform_indices = @transform_0, window_bounds = array<i64: 8, 1>}, {transform_indices = @transform_1, window_bounds = array<i64: 8, 16>}, {transform_indices = @transform_2, window_bounds = array<i64: 8, 16>}, {transform_indices = @transform_3, window_bounds = array<i64: 8, 128>}]} {
    %c0 = arith.constant 0 : index
    %c0_0 = arith.constant 0 : index
    %0 = vector.load %arg2[%c0, %c0_0] : memref<8x16xf32, #tpu.memory_space<vmem>>, vector<8x16xf32>
    %c0_1 = arith.constant 0 : index
    %c0_2 = arith.constant 0 : index
    %1 = vector.load %arg3[%c0_1, %c0_2] : memref<8x16xi32, #tpu.memory_space<vmem>>, vector<8x16xi32>
    %c0_3 = arith.constant 0 : index
    %c0_4 = arith.constant 0 : index
    %2 = vector.load %arg1[%c0_3, %c0_4] : memref<8x1xi32, #tpu.memory_space<vmem>>, vector<8x1xi32>
    %3 = tpu.iota {dimensions = array<i32: 1>} : vector<8x16xi32>
    %4 = vector.broadcast %2 : vector<8x1xi32> to vector<8x16xi32>
    %5 = arith.cmpi eq, %3, %4 : vector<8x16xi32>
    %cst = arith.constant 0.000000e+00 : f32
    %6 = vector.broadcast %cst : f32 to vector<8x16xf32>
    %7 = arith.select %5, %0, %6 : vector<8x16xi1>, vector<8x16xf32>
    %cst_5 = arith.constant dense<0.000000e+00> : vector<8xf32>
    %8 = vector.multi_reduction <add>, %7, %cst_5 [1] : vector<8x16xf32> to vector<8xf32>
    %9 = vector.shape_cast %8 : vector<8xf32> to vector<8x1xf32>
    %c4_i32 = arith.constant 4 : i32
    %10 = vector.broadcast %c4_i32 : i32 to vector<8x16xi32>
    %11 = arith.shli %1, %10 : vector<8x16xi32>
    %12 = arith.ori %11, %3 : vector<8x16xi32>
    %cst_6 = arith.constant dense<true> : vector<8x16xi1>
    %13 = arith.xori %5, %cst_6 : vector<8x16xi1>
    %cst_7 = arith.constant 1.000000e+00 : f32
    %14 = vector.broadcast %cst_7 : f32 to vector<8x16xf32>
    %15 = arith.addf %14, %0 : vector<8x16xf32>
    %16 = vector.broadcast %9 : vector<8x1xf32> to vector<8x16xf32>
    %17 = arith.subf %15, %16 : vector<8x16xf32>
    %cst_8 = arith.constant 0.000000e+00 : f32
    %18 = vector.broadcast %cst_8 : f32 to vector<8x16xf32>
    %19 = arith.cmpf oge, %17, %18 : vector<8x16xf32>
    %20 = arith.andi %13, %19 : vector<8x16xi1>
    %c1073741824_i32 = arith.constant 1073741824 : i32
    %21 = vector.broadcast %c1073741824_i32 : i32 to vector<8x16xi32>
    %22 = arith.select %20, %12, %21 : vector<8x16xi1>, vector<8x16xi32>
    %cst_9 = arith.constant dense<2147483647> : vector<8xi32>
    %23 = vector.multi_reduction <minsi>, %22, %cst_9 [1] : vector<8x16xi32> to vector<8xi32>
    %24 = vector.shape_cast %23 : vector<8xi32> to vector<8x1xi32>
    %c1073741824_i32_10 = arith.constant 1073741824 : i32
    %25 = vector.broadcast %c1073741824_i32_10 : i32 to vector<8x1xi32>
    %26 = arith.cmpi slt, %24, %25 : vector<8x1xi32>
    %c15_i32 = arith.constant 15 : i32
    %27 = vector.broadcast %c15_i32 : i32 to vector<8x1xi32>
    %28 = arith.andi %24, %27 : vector<8x1xi32>
    %29 = vector.broadcast %28 : vector<8x1xi32> to vector<8x16xi32>
    %30 = arith.cmpi eq, %3, %29 : vector<8x16xi32>
    %cst_11 = arith.constant 0.000000e+00 : f32
    %31 = vector.broadcast %cst_11 : f32 to vector<8x16xf32>
    %32 = arith.select %30, %0, %31 : vector<8x16xi1>, vector<8x16xf32>
    %cst_12 = arith.constant dense<0.000000e+00> : vector<8xf32>
    %33 = vector.multi_reduction <add>, %32, %cst_12 [1] : vector<8x16xf32> to vector<8xf32>
    %34 = vector.shape_cast %33 : vector<8xf32> to vector<8x1xf32>
    %c1073741824_i32_13 = arith.constant 1073741824 : i32
    %35 = vector.broadcast %c1073741824_i32_13 : i32 to vector<8x16xi32>
    %36 = arith.select %13, %12, %35 : vector<8x16xi1>, vector<8x16xi32>
    %37 = vector.broadcast %24 : vector<8x1xi32> to vector<8x16xi32>
    %38 = arith.cmpi slt, %36, %37 : vector<8x16xi32>
    %39 = arith.extui %38 : vector<8x16xi1> to vector<8x16xi32>
    %40 = arith.sitofp %39 : vector<8x16xi32> to vector<8x16xf32>
    %cst_14 = arith.constant dense<0.000000e+00> : vector<8xf32>
    %41 = vector.multi_reduction <add>, %40, %cst_14 [1] : vector<8x16xf32> to vector<8xf32>
    %42 = vector.shape_cast %41 : vector<8xf32> to vector<8x1xf32>
    %cst_15 = arith.constant 1.000000e+00 : f32
    %43 = vector.broadcast %cst_15 : f32 to vector<8x1xf32>
    %44 = arith.addf %43, %42 : vector<8x1xf32>
    %cst_16 = arith.constant 1.500000e+01 : f32
    %45 = vector.broadcast %cst_16 : f32 to vector<8x1xf32>
    %46 = arith.cmpf ole, %44, %45 : vector<8x1xf32>
    %47 = arith.andi %26, %46 : vector<8x1xi1>
    %c0_i32 = arith.constant 0 : i32
    %48 = vector.broadcast %c0_i32 : i32 to vector<8x1xi32>
    %49 = arith.cmpi sge, %2, %48 : vector<8x1xi32>
    %50 = arith.andi %47, %49 : vector<8x1xi1>
    %cst_17 = arith.constant 1.500000e+01 : f32
    %51 = vector.broadcast %cst_17 : f32 to vector<8x1xf32>
    %52 = arith.divf %51, %44 : vector<8x1xf32>
    %53 = math.floor %52 : vector<8x1xf32>
    %cst_18 = arith.constant 1.000000e+00 : f32
    %54 = vector.broadcast %cst_18 : f32 to vector<8x1xf32>
    %55 = arith.maximumf %53, %54 : vector<8x1xf32>
    %56 = math.log %55 : vector<8x1xf32>
    %cst_19 = arith.constant 0.000000e+00 : f32
    %57 = vector.broadcast %cst_19 : f32 to vector<8x1xf32>
    %58 = arith.select %50, %56, %57 : vector<8x1xi1>, vector<8x1xf32>
    %cst_20 = arith.constant 1.000000e+00 : f32
    %59 = vector.broadcast %cst_20 : f32 to vector<8x1xf32>
    %60 = arith.subf %59, %9 : vector<8x1xf32>
    %61 = arith.addf %60, %34 : vector<8x1xf32>
    %62 = arith.mulf %58, %61 : vector<8x1xf32>
    %cst_21 = arith.constant dense<0.000000e+00> : vector<1xf32>
    %63 = vector.multi_reduction <add>, %62, %cst_21 [0] : vector<8x1xf32> to vector<1xf32>
    %64 = vector.shape_cast %63 : vector<1xf32> to vector<1x1xf32>
    %65 = vector.shape_cast %64 : vector<1x1xf32> to vector<1x1xf32>
    %66 = vector.broadcast %65 : vector<1x1xf32> to vector<8x128xf32>
    %c0_22 = arith.constant 0 : index
    %c0_23 = arith.constant 0 : index
    %67 = vector.load %arg4[%c0_22, %c0_23] : memref<8x128xf32, #tpu.memory_space<vmem>>, vector<8x128xf32>
    tpu.vector_store %arg4[%c0_22, %c0_23], %66 {strides = array<i32>} : memref<8x128xf32, #tpu.memory_space<vmem>>, vector<8x128xf32>,
    return
  }
  func.func @transform_0(%arg0: i32) -> (i32, i32) {
    %c0_i32 = arith.constant 0 : i32
    %c0_i32_0 = arith.constant 0 : i32
    return %arg0, %c0_i32 : i32, i32
  }
  func.func @transform_1(%arg0: i32) -> (i32, i32) {
    %c0_i32 = arith.constant 0 : i32
    %c0_i32_0 = arith.constant 0 : i32
    return %arg0, %c0_i32 : i32, i32
  }
  func.func @transform_2(%arg0: i32) -> (i32, i32) {
    %c0_i32 = arith.constant 0 : i32
    %c0_i32_0 = arith.constant 0 : i32
    return %arg0, %c0_i32 : i32, i32
  }
  func.func @transform_3(%arg0: i32) -> (i32, i32) {
    %c0_i32 = arith.constant 0 : i32
    %c0_i32_0 = arith.constant 0 : i32
    return %arg0, %c0_i32 : i32, i32
  }
}

</mosaic_0001>

<llo_original>
// kernel: tpu_custom_call.1
$region0: #{tpu_custom_call.1}
  #allocation0 [shape = 'u32[]', space=smem, size = 0x4, offset = 0x4, fixed_abs, tag = 'smem constant byte address 0x4 - core index']
  #allocation1 [shape = 'u32[72,128]{1,0:T(1,128)}', space=vmem, size = 0x9000, scoped, tag = 'internal scratch']
  %s0 = inlined_call_operand.vmem [shape: s32[8,1], index: 0, kind: input, shape index: {}]
  %s1 = inlined_call_operand.vmem [shape: f32[8,16], index: 1, kind: input, shape index: {}]
  %s2 = inlined_call_operand.hbm [shape: s32[8,16], index: 2, kind: input, shape index: {}]
  %s3 = inlined_call_operand.hbm [shape: f32[8,128], index: 3, kind: output, shape index: {}]
  %s4 = sld [smem:[#allocation0]]
  $region26: #{tpu_custom_call.1} parent=0
    _
  %s6 = ssub.s32 1, %s4
  %s7 = scalar_select 0, %s6, %s4
  $region1: #{tpu_custom_call.1} parent=0
    #allocation2 [shape = 'u8[4096]{0}', space=vmem, size = 0x1000, scoped, tag = 'input window, operand 2, single buffered']
    #allocation3 [shape = 's32[1]{0}', space=sflag, size = 0x4, scoped, tag = 'scoped memory for tpu_custom_call.1']
    #allocation4 [shape = 's32[1]{0}', space=sflag, size = 0x4, scoped, tag = 'scoped memory for tpu_custom_call.1']
    #allocation5 [shape = 'u8[4096]{0}', space=vmem, size = 0x1000, scoped, tag = 'output window, operand 0, single buffered']
    %8 = vsyncpa [#allocation3], 0
    %9 = vsyncpa [#allocation4], 0
    // Predicated region
    $region2: #{tpu_custom_call.1} parent=1 // pred_check
      _
    $region3: #{tpu_custom_call.1} parent=1 // pred_check_branch
      %11 = sbr.rel (0) target = $region5
    $region4: #{tpu_custom_call.1} parent=1 // pred_region
      _
    $region5: #{tpu_custom_call.1} parent=1 // pred_fallthru
      _
    // Predicated region
    $region6: #{tpu_custom_call.1} parent=1 // pred_check
      _
    $region7: #{tpu_custom_call.1} parent=1 // pred_check_branch
      %13 = sbr.rel (0) target = $region9
    $region8: #{tpu_custom_call.1} parent=1 // pred_region
      _
    $region9: #{tpu_custom_call.1} parent=1 // pred_fallthru
      _
    // Predicated region
    $region10: #{tpu_custom_call.1} parent=1 // pred_check
      _
    $region11: #{tpu_custom_call.1} parent=1 // pred_check_branch
      %15 = sbr.rel (0) target = $region13
    $region12: #{tpu_custom_call.1} parent=1 // pred_region
      %17 = vsyncadd [#allocation3], 0
      %s19 = sshll.u32 %s2, 4
      %s20 = int_to_ptr.hbm [resolvable:$true] %s19
      %s21 = sshll.u32 [#allocation2], 4
      %s22 = int_to_ptr.vmem [resolvable:$true] %s21
      %24 = dma.hbm_to_vmem [thread:$0]  %s20, 128, %s22, [#allocation3]
    $region13: #{tpu_custom_call.1} parent=1 // pred_fallthru
      _
    // Predicated region
    $region14: #{tpu_custom_call.1} parent=1 // pred_check
      _
    $region15: #{tpu_custom_call.1} parent=1 // pred_check_branch
      %26 = sbr.rel (0) target = $region17
    $region16: #{tpu_custom_call.1} parent=1 // pred_region
      %28 = dma.done [#allocation3], 128
    $region17: #{tpu_custom_call.1} parent=1 // pred_fallthru
      _
    %v29 = vld [vmem:[%s1] sm:$0xff]
    %v30 = vld [vmem:[#allocation2] sm:$0xff]
    %v31 = vld [vmem:[%s0] sm:$0xff]
    %v32 = vlaneseq
    %v33 = vand.u32 %v32, 127
    %34 = vset.pattern.permute.xlu0 0
    %35 = vperm.xlu0 %34, %v31
    %v36 = vpop.permute.xlu0 %35
    %vm37 = vcmp.eq.s32.totalorder %v33, %v36
    %v38 = vsel %vm37, %v29, 0.0
    %vm39 = vcmask 130048
    %v40 = vsel %vm39, %v38, 0.0
    %41 = vadd.xlane.f32.xlu0 %v40
    %v42 = vpop.xlane.xlu0 %41
    %v43 = vshll.u32 %v30, 4
    %v44 = vor.u32 %v43, %v33
    %vm45 = vmxor %vm37, 1
    %v46 = vadd.f32 %v29, 1.0
    %v47 = vsub.f32 %v46, %v42
    %vm48 = vcmp.ge.f32.partialorder %v47, 0.0
    %vm49 = vmand %vm45, %vm48
    %v50 = vsel %vm49, %v44, 1073741824
    %v51 = vsel %vm39, %v50, 2147483647
    %v52 = vand.u32 %v51, 65535
    %v53 = vshra.s32 %v51, 16
    %v54 = vcvt.s32.f32 %v52
    %v55 = vcvt.s32.f32 %v53
    %56 = vmin.xlane.f32.xlu0 %v55
    %v57 = vpop.xlane.xlu0 %56
    %vm58 = vcmp.eq.f32.partialorder %v55, %v57
    %v59 = vsel %vm58, %v54, inf
    %60 = vmin.xlane.f32.xlu0 %v59
    %v61 = vpop.xlane.xlu0 %60
    %v62 = vcvt.f32.s32 %v61
    %v63 = vcvt.f32.s32 %v57
    %v64 = vshll.u32 %v63, 16
    %v65 = vadd.s32 %v64, %v62
    %vm66 = vcmp.lt.s32.totalorder %v65, 1073741824
    %v67 = vand.u32 %v65, 15
    %vm68 = vcmp.eq.s32.totalorder %v33, %v67
    %v69 = vsel %vm68, %v29, 0.0
    %v70 = vsel %vm39, %v69, 0.0
    %71 = vadd.xlane.f32.xlu0 %v70
    %v72 = vpop.xlane.xlu0 %71
    %v73 = vsel %vm45, %v44, 1073741824
    %vm74 = vcmp.lt.s32.totalorder %v73, %v65
    %v75 = vsel %vm74, 1, 0
    %v76 = vcvt.s32.f32 %v75
    %v77 = vsel %vm39, %v76, 0.0
    %78 = vadd.xlane.f32.xlu0 %v77
    %v79 = vpop.xlane.xlu0 %78
    %v80 = vadd.f32 %v79, 1.0
    %vm81 = vcmp.le.f32.partialorder %v80, 15.0
    %vm82 = vmand %vm66, %vm81
    %vm83 = vcmp.ge.s32.totalorder %v31, 0
    %vm84 = vmand %vm82, %vm83
    %v85 = vrcp.pop %v80
    %v86 = vmul.f32 %v80, %v85
    %v87 = vsub.f32 1.0, %v86
    %v88 = vmul.f32 %v85, %v87
    %v89 = vadd.f32 %v85, %v88
    %vm90 = vweird.f32 %v80
    %vm91 = vweird.f32 %v85
    %vm92 = vmor %vm90, %vm91
    %v93 = vsel %vm92, %v85, %v89
    %v94 = vand.u32 2147483647, %v80
    %vm95 = vcmp.eq.f32.partialorder %v94, 8.507059e+37
    %v96 = vand.u32 %v80, 2147483648
    %v97 = vor.u32 1.1754944e-38, %v96
    %v98 = vsel %vm95, %v97, %v93
    %v99 = vmul.f32 15.0, %v98
    %v100 = vfloor.f32 %v99
    %v101 = vmax.f32 %v100, 1.0
    %v102 = vlog2.pop %v101
    %v103 = vmul.f32 %v102, 0.6931472
    %v104 = vsel %vm84, %v103, 0.0
    %v105 = vsub.f32 1.0, %v42
    %v106 = vadd.f32 %v105, %v72
    %v107 = vmul.f32 %v104, %v106
    %vm108 = vcmask 7168
    %v109 = vsel %vm108, %v107, 0.0
    %v110 = vrot.slane %v109, 4
    %v111 = vadd.f32 %v109, %v110
    %v112 = vrot.slane %v111, 2
    %v113 = vadd.f32 %v111, %v112
    %v114 = vrot.slane %v113, 1
    %v115 = vadd.f32 %v113, %v114
    %117 = vset.pattern.permute.xlu0 0
    %118 = vperm.xlu0 %117, %v115
    %v119 = vpop.permute.xlu0 %118
    %121 = vst [vmem:[#allocation5] sm:$0xff] %v119
    // Predicated region
    $region18: #{tpu_custom_call.1} parent=1 // pred_check
      _
    $region19: #{tpu_custom_call.1} parent=1 // pred_check_branch
      %123 = sbr.rel (0) target = $region21
    $region20: #{tpu_custom_call.1} parent=1 // pred_region
      %125 = vsyncadd [#allocation4], 0
      %s127 = sshll.u32 [#allocation5], 4
      %s128 = int_to_ptr.vmem [resolvable:$true] %s127
      %s129 = sshll.u32 %s3, 4
      %s130 = int_to_ptr.hbm [resolvable:$true] %s129
      %132 = dma.vmem_to_hbm [thread:$0]  %s128, 128, %s130, [#allocation4]
    $region21: #{tpu_custom_call.1} parent=1 // pred_fallthru
      _
    // Predicated region
    $region22: #{tpu_custom_call.1} parent=1 // pred_check
      _
    $region23: #{tpu_custom_call.1} parent=1 // pred_check_branch
      %134 = sbr.rel (0) target = $region25
    $region24: #{tpu_custom_call.1} parent=1 // pred_region
      %136 = dma.done [#allocation4], 128
    $region25: #{tpu_custom_call.1} parent=1 // pred_fallthru
      _
    %137 = vsyncpa [#allocation3], 1
    %138 = vsyncpa [#allocation4], 1

</llo_original>
